<compile_context>
chip_gen: v7x
topology: tpu7x:2x2x1
jax: 0.10.0
libtpu: 0.0.40
codegen_flags: <defaults>
</compile_context>

<pallas_src>
import jax
import jax.numpy as jnp
from jax.experimental import pallas as pl
from jax.experimental.pallas import tpu as pltpu


LEAKY_SLOPE = 0.01            # nn.LeakyReLU default negative_slope
BN_EPS = 1e-5                 # nn.BatchNorm1d default eps
N_PHASES = 5
TILE_B_MAX = 4096             # multiple of 8; ~2.4 MiB of x+out stream at d_in=64
VMEM_BUDGET = 28 * 1024 * 1024  # plan data (tiles + caches) against v7x 64 MiB w/ headroom


def _leaky_relu(h):
    return jnp.where(h > 0, h, LEAKY_SLOPE * h)


def _make_kernel(batch, tile_b, use_cache):
    needs_mask = (batch % tile_b) != 0
    inv_n = 1.0 / float(batch)

    def kernel(x_ref,
               w1_ref, g1_ref, be1_ref,
               w2_ref, g2_ref, be2_ref,
               w3_ref, b3_ref,
               o_ref,
               *scratch):
        if use_cache:
            (z1c, z2c, s1, c1, s2, c2, sc1, sh1, sc2, sh2) = scratch
        else:
            (s1, c1, s2, c2, sc1, sh1, sc2, sh2) = scratch

        phase = pl.program_id(0)
        tile = pl.program_id(1)
        row0 = pl.multiple_of(tile * tile_b, tile_b)

        @pl.when(jnp.logical_and(phase == 0, tile == 0))
        def _init():
            s1[...] = jnp.zeros_like(s1)
            c1[...] = jnp.zeros_like(c1)
            s2[...] = jnp.zeros_like(s2)
            c2[...] = jnp.zeros_like(c2)

        if needs_mask:
            rows = jax.lax.broadcasted_iota(jnp.int32, (tile_b, 1), 0) + tile * tile_b
            valid = rows < batch
        else:
            valid = None

        def masked(v):
            return v if valid is None else jnp.where(valid, v, 0.0)

        def raw_z1():
            return jnp.dot(x_ref[...], w1_ref[...], preferred_element_type=jnp.float32)

        def get_z1():
            if use_cache:
                return z1c[pl.ds(row0, tile_b), :]
            return raw_z1()

        def get_z2():
            if use_cache:
                return z2c[pl.ds(row0, tile_b), :]
            h1 = _leaky_relu(get_z1() * sc1[...] + sh1[...])
            return jnp.dot(h1, w2_ref[...], preferred_element_type=jnp.float32)

        # Phase 0: z1 = x @ w1 (b1 cancelled by train-mode BN1); accumulate sum.
        @pl.when(phase == 0)
        def _p0():
            z1 = raw_z1()
            if use_cache:
                z1c[pl.ds(row0, tile_b), :] = z1
            s1[...] += jnp.sum(masked(z1), axis=0, keepdims=True)

        # Phase 1: exact centered sum of squares for BN1 (mean1 is final now).
        @pl.when(phase == 1)
        def _p1():
            d = masked(get_z1() - s1[...] * inv_n)
            c1[...] += jnp.sum(d * d, axis=0, keepdims=True)

        # Phase 2: apply BN1 + LeakyReLU, z2 = h1 @ w2 (b2 cancelled by BN2).
        @pl.when(phase == 2)
        def _p2():
            @pl.when(tile == 0)
            def _():
                mean = s1[...] * inv_n
                var = c1[...] * inv_n
                sc1[...] = g1_ref[...] * jax.lax.rsqrt(var + BN_EPS)
                sh1[...] = be1_ref[...] - mean * sc1[...]
            h1 = _leaky_relu(get_z1() * sc1[...] + sh1[...])
            z2 = jnp.dot(h1, w2_ref[...], preferred_element_type=jnp.float32)
            if use_cache:
                z2c[pl.ds(row0, tile_b), :] = z2
            s2[...] += jnp.sum(masked(z2), axis=0, keepdims=True)

        # Phase 3: exact centered sum of squares for BN2.
        @pl.when(phase == 3)
        def _p3():
            d = masked(get_z2() - s2[...] * inv_n)
            c2[...] += jnp.sum(d * d, axis=0, keepdims=True)

        # Phase 4: apply BN2 + LeakyReLU, final Linear, single HBM store.
        @pl.when(phase == 4)
        def _p4():
            @pl.when(tile == 0)
            def _():
                mean = s2[...] * inv_n
                var = c2[...] * inv_n
                sc2[...] = g2_ref[...] * jax.lax.rsqrt(var + BN_EPS)
                sh2[...] = be2_ref[...] - mean * sc2[...]
            h2 = _leaky_relu(get_z2() * sc2[...] + sh2[...])
            out = jnp.dot(h2, w3_ref[...], preferred_element_type=jnp.float32) + b3_ref[...]
            o_ref[...] = out.astype(o_ref.dtype)

    return kernel


def _resident_spec(shape):
    # Whole array resident in VMEM; constant block index -> DMA'd once.
    return pl.BlockSpec(shape, lambda p, t: (0,) * len(shape))


def _choose_tiling(B, d_in, h1, h2, nc):
    tile_b = B if B <= TILE_B_MAX else TILE_B_MAX
    n_tiles = pl.cdiv(B, tile_b)
    f32 = 4
    stream = 2 * tile_b * (d_in + nc) * f32                   # double-buffered x + out blocks
    weights = 2 * (d_in * h1 + h1 * h2 + h2 * nc + 4 * (h1 + h2) + nc) * f32
    cache = n_tiles * tile_b * (h1 + h2) * f32                # full-batch z1/z2 caches
    use_cache = (stream + weights + cache) <= VMEM_BUDGET
    vmem_bytes = stream + weights + (cache if use_cache else 0)
    vmem_limit = min(48 << 20, max(16 << 20, vmem_bytes + (8 << 20)))
    return tile_b, n_tiles, use_cache, vmem_limit


@jax.jit
def simplenet_forward(x, params):
    """x: (B, input_size) f32. params: dict with (in, out)-layout weights."""
    B, d_in = x.shape
    h1 = params["w1"].shape[1]
    h2 = params["w2"].shape[1]
    nc = params["w3"].shape[1]

    tile_b, n_tiles, use_cache, vmem_limit = _choose_tiling(B, d_in, h1, h2, nc)
    grid = (N_PHASES, n_tiles)          # (phase, batch tile); both sequential
    kernel = _make_kernel(B, tile_b, use_cache)

    if use_cache:
        # x only needs to stream in phase 0; afterwards hold the last block (no re-DMA).
        x_map = lambda p, t: (jnp.where(p == 0, t, n_tiles - 1), 0)
    else:
        # TODO(synk): spill z1/z2 to small HBM side-outputs for very large B instead
        # of recomputing from x in every phase.
        x_map = lambda p, t: (t, 0)

    in_specs = [
        pl.BlockSpec((tile_b, d_in), x_map),
        _resident_spec(params["w1"].shape),
        _resident_spec(params["g1"].shape),
        _resident_spec(params["be1"].shape),
        _resident_spec(params["w2"].shape),
        _resident_spec(params["g2"].shape),
        _resident_spec(params["be2"].shape),
        _resident_spec(params["w3"].shape),
        _resident_spec(params["b3"].shape),
    ]
    # Output block only sweeps (and writes back) in the final phase.
    out_spec = pl.BlockSpec((tile_b, nc),
                            lambda p, t: (jnp.where(p == N_PHASES - 1, t, 0), 0))

    scratch = []
    if use_cache:
        scratch += [pltpu.VMEM((n_tiles * tile_b, h1), jnp.float32),   # z1 cache
                    pltpu.VMEM((n_tiles * tile_b, h2), jnp.float32)]   # z2 cache
    scratch += [
        pltpu.VMEM((1, h1), jnp.float32),   # BN1 sum
        pltpu.VMEM((1, h1), jnp.float32),   # BN1 centered sum of squares
        pltpu.VMEM((1, h2), jnp.float32),   # BN2 sum
        pltpu.VMEM((1, h2), jnp.float32),   # BN2 centered sum of squares
        pltpu.VMEM((1, h1), jnp.float32),   # BN1 scale
        pltpu.VMEM((1, h1), jnp.float32),   # BN1 shift
        pltpu.VMEM((1, h2), jnp.float32),   # BN2 scale
        pltpu.VMEM((1, h2), jnp.float32),   # BN2 shift
    ]

    return pl.pallas_call(
        kernel,
        out_shape=jax.ShapeDtypeStruct((B, nc), jnp.float32),
        grid_spec=pltpu.PrefetchScalarGridSpec(
            num_scalar_prefetch=0,
            grid=grid,
            in_specs=in_specs,
            out_specs=out_spec,
            scratch_shapes=scratch,
        ),
        compiler_params=pltpu.CompilerParams(
            # Whole-batch BN statistics make both axes sequential.
            dimension_semantics=("arbitrary", "arbitrary"),
            vmem_limit_bytes=int(vmem_limit)),
    )(x, params["w1"], params["g1"], params["be1"],
      params["w2"], params["g2"], params["be2"],
      params["w3"], params["b3"])


def init_params(key, input_size, num_classes):
    """Mirror nn.Linear (uniform +-1/sqrt(fan_in)) and nn.BatchNorm1d defaults.
    Weights stored as (in, out).  b1/b2 exist for fidelity with the module but
    are NOT passed to the kernel (training-mode BN cancels them exactly)."""
    def linear(k, fan_in, fan_out):
        kw, kb = jax.random.split(k)
        bound = 1.0 / jnp.sqrt(jnp.float32(fan_in))
        w = jax.random.uniform(kw, (fan_in, fan_out), jnp.float32, -bound, bound)
        b = jax.random.uniform(kb, (1, fan_out), jnp.float32, -bound, bound)
        return w, b

    k1, k2, k3 = jax.random.split(key, 3)
    w1, b1 = linear(k1, input_size, 32)
    w2, b2 = linear(k2, 32, 16)
    w3, b3 = linear(k3, 16, num_classes)
    return {
        "w1": w1, "b1": b1,
        "g1": jnp.ones((1, 32), jnp.float32), "be1": jnp.zeros((1, 32), jnp.float32),
        "w2": w2, "b2": b2,
        "g2": jnp.ones((1, 16), jnp.float32), "be2": jnp.zeros((1, 16), jnp.float32),
        "w3": w3, "b3": b3,
    }


def simplenet_reference(x, params):
    """Pure-JAX reference (includes b1/b2; training-mode BN cancels them)."""
    def bn(h, g, b):
        mean = jnp.mean(h, axis=0, keepdims=True)
        var = jnp.mean((h - mean) ** 2, axis=0, keepdims=True)
        return (h - mean) * jax.lax.rsqrt(var + BN_EPS) * g + b

    h = _leaky_relu(bn(x @ params["w1"] + params["b1"], params["g1"], params["be1"]))
    h = _leaky_relu(bn(h @ params["w2"] + params["b2"], params["g2"], params["be2"]))
    return h @ params["w3"] + params["b3"]


# TODO(synk): BatchNorm1d running_mean/running_var momentum updates (a training
# side effect that does not affect this forward's output) are not emitted.

if __name__ == "__main__":
    input_size = 64
    num_classes = 10
    batch = 8

    key = jax.random.PRNGKey(0)
    kx, kp = jax.random.split(key)
    x = jax.random.normal(kx, (batch, input_size), jnp.float32)
    params = init_params(kp, input_size, num_classes)

    out = simplenet_forward(x, params)
    jax.block_until_ready(out)
    assert out.shape == (batch, num_classes)

    ref = simplenet_reference(x, params)
    assert jnp.allclose(out, ref, rtol=1e-4, atol=1e-4), (
        float(jnp.max(jnp.abs(out - ref))))

    print("KERNEL_OK")
</pallas_src>

<mosaic_0001>
module attributes {stable_mosaic.version = 11 : i64} {
  func.func @kernel(%arg0: i32, %arg1: i32, %arg2: memref<8x64xf32, #tpu.memory_space<vmem>>, %arg3: memref<64x32xf32, #tpu.memory_space<vmem>>, %arg4: memref<1x32xf32, #tpu.memory_space<vmem>>, %arg5: memref<1x32xf32, #tpu.memory_space<vmem>>, %arg6: memref<32x16xf32, #tpu.memory_space<vmem>>, %arg7: memref<1x16xf32, #tpu.memory_space<vmem>>, %arg8: memref<1x16xf32, #tpu.memory_space<vmem>>, %arg9: memref<16x10xf32, #tpu.memory_space<vmem>>, %arg10: memref<1x10xf32, #tpu.memory_space<vmem>>, %arg11: memref<8x10xf32, #tpu.memory_space<vmem>>, %arg12: memref<8x32xf32, #tpu.memory_space<vmem>>, %arg13: memref<8x16xf32, #tpu.memory_space<vmem>>, %arg14: memref<1x32xf32, #tpu.memory_space<vmem>>, %arg15: memref<1x32xf32, #tpu.memory_space<vmem>>, %arg16: memref<1x16xf32, #tpu.memory_space<vmem>>, %arg17: memref<1x16xf32, #tpu.memory_space<vmem>>, %arg18: memref<1x32xf32, #tpu.memory_space<vmem>>, %arg19: memref<1x32xf32, #tpu.memory_space<vmem>>, %arg20: memref<1x16xf32, #tpu.memory_space<vmem>>, %arg21: memref<1x16xf32, #tpu.memory_space<vmem>>) attributes {dimension_semantics = [#tpu.dimension_semantics<arbitrary>, #tpu.dimension_semantics<arbitrary>], iteration_bounds = array<i64: 5, 1>, scalar_prefetch = 0 : i64, scratch_operands = 10 : i64, tpu.core_type = #tpu.core_type<tc>, window_params = [{transform_indices = @transform_0, window_bounds = array<i64: 8, 64>}, {pipeline_mode = #tpu.pipeline_mode<synchronous>, transform_indices = @transform_1, window_bounds = array<i64: 64, 32>}, {pipeline_mode = #tpu.pipeline_mode<synchronous>, transform_indices = @transform_2, window_bounds = array<i64: 1, 32>}, {pipeline_mode = #tpu.pipeline_mode<synchronous>, transform_indices = @transform_3, window_bounds = array<i64: 1, 32>}, {pipeline_mode = #tpu.pipeline_mode<synchronous>, transform_indices = @transform_4, window_bounds = array<i64: 32, 16>}, {pipeline_mode = #tpu.pipeline_mode<synchronous>, transform_indices = @transform_5, window_bounds = array<i64: 1, 16>}, {pipeline_mode = #tpu.pipeline_mode<synchronous>, transform_indices = @transform_6, window_bounds = array<i64: 1, 16>}, {pipeline_mode = #tpu.pipeline_mode<synchronous>, transform_indices = @transform_7, window_bounds = array<i64: 16, 10>}, {pipeline_mode = #tpu.pipeline_mode<synchronous>, transform_indices = @transform_8, window_bounds = array<i64: 1, 10>}, {transform_indices = @transform_9, window_bounds = array<i64: 8, 10>}]} {
    %c8_i32 = arith.constant 8 : i32
    %0 = arith.muli %arg1, %c8_i32 : i32
    %1 = tpu.assume_multiple %0, 8 : i32
    %c0_i32 = arith.constant 0 : i32
    %2 = arith.cmpi eq, %arg0, %c0_i32 : i32
    %c0_i32_0 = arith.constant 0 : i32
    %3 = arith.cmpi eq, %arg1, %c0_i32_0 : i32
    %4 = arith.andi %2, %3 : i1
    %5 = arith.extui %4 : i1 to i32
    %c0_i32_1 = arith.constant 0 : i32
    %6 = arith.cmpi ne, %5, %c0_i32_1 : i32
    scf.if %6 {
      %cst = arith.constant 0.000000e+00 : f32
      %22 = vector.broadcast %cst : f32 to vector<1x32xf32>
      %c0 = arith.constant 0 : index
      %c0_8 = arith.constant 0 : index
      %23 = vector.load %arg14[%c0, %c0_8] : memref<1x32xf32, #tpu.memory_space<vmem>>, vector<1x32xf32>
      tpu.vector_store %arg14[%c0, %c0_8], %22 {strides = array<i32>} : memref<1x32xf32, #tpu.memory_space<vmem>>, vector<1x32xf32>,
      %cst_9 = arith.constant 0.000000e+00 : f32
      %24 = vector.broadcast %cst_9 : f32 to vector<1x32xf32>
      %c0_10 = arith.constant 0 : index
      %c0_11 = arith.constant 0 : index
      %25 = vector.load %arg15[%c0_10, %c0_11] : memref<1x32xf32, #tpu.memory_space<vmem>>, vector<1x32xf32>
      tpu.vector_store %arg15[%c0_10, %c0_11], %24 {strides = array<i32>} : memref<1x32xf32, #tpu.memory_space<vmem>>, vector<1x32xf32>,
      %cst_12 = arith.constant 0.000000e+00 : f32
      %26 = vector.broadcast %cst_12 : f32 to vector<1x16xf32>
      %c0_13 = arith.constant 0 : index
      %c0_14 = arith.constant 0 : index
      %27 = vector.load %arg16[%c0_13, %c0_14] : memref<1x16xf32, #tpu.memory_space<vmem>>, vector<1x16xf32>
      tpu.vector_store %arg16[%c0_13, %c0_14], %26 {strides = array<i32>} : memref<1x16xf32, #tpu.memory_space<vmem>>, vector<1x16xf32>,
      %cst_15 = arith.constant 0.000000e+00 : f32
      %28 = vector.broadcast %cst_15 : f32 to vector<1x16xf32>
      %c0_16 = arith.constant 0 : index
      %c0_17 = arith.constant 0 : index
      %29 = vector.load %arg17[%c0_16, %c0_17] : memref<1x16xf32, #tpu.memory_space<vmem>>, vector<1x16xf32>
      tpu.vector_store %arg17[%c0_16, %c0_17], %28 {strides = array<i32>} : memref<1x16xf32, #tpu.memory_space<vmem>>, vector<1x16xf32>,
    } else {
    }
    %c0_i32_2 = arith.constant 0 : i32
    %7 = arith.cmpi eq, %arg0, %c0_i32_2 : i32
    %8 = arith.extui %7 : i1 to i32
    %c0_i32_3 = arith.constant 0 : i32
    %9 = arith.cmpi ne, %8, %c0_i32_3 : i32
    scf.if %9 {
      %c0 = arith.constant 0 : index
      %c0_8 = arith.constant 0 : index
      %22 = vector.load %arg2[%c0, %c0_8] : memref<8x64xf32, #tpu.memory_space<vmem>>, vector<8x64xf32>
      %c0_9 = arith.constant 0 : index
      %c0_10 = arith.constant 0 : index
      %23 = vector.load %arg3[%c0_9, %c0_10] : memref<64x32xf32, #tpu.memory_space<vmem>>, vector<64x32xf32>
      %cst = arith.constant dense<0.000000e+00> : vector<8x32xf32>
      %24 = tpu.matmul %22, %23, %cst {dimension_numbers = #tpu.dot_dimension_numbers<[1], [0], [0], [1], [0, 0, 1, 1], [], []>} : vector<8x64xf32>, vector<64x32xf32>, vector<8x32xf32> -> vector<8x32xf32>
      %25 = arith.index_cast %1 : i32 to index
      %c0_11 = arith.constant 0 : index
      %26 = vector.load %arg12[%25, %c0_11] : memref<8x32xf32, #tpu.memory_space<vmem>>, vector<8x32xf32>
      tpu.vector_store %arg12[%25, %c0_11], %24 {strides = array<i32>} : memref<8x32xf32, #tpu.memory_space<vmem>>, vector<8x32xf32>,
      %c0_12 = arith.constant 0 : index
      %c0_13 = arith.constant 0 : index
      %27 = vector.load %arg14[%c0_12, %c0_13] : memref<1x32xf32, #tpu.memory_space<vmem>>, vector<1x32xf32>
      %cst_14 = arith.constant dense<0.000000e+00> : vector<32xf32>
      %28 = vector.multi_reduction <add>, %24, %cst_14 [0] : vector<8x32xf32> to vector<32xf32>
      %29 = vector.shape_cast %28 : vector<32xf32> to vector<1x32xf32>
      %30 = arith.addf %27, %29 : vector<1x32xf32>
      %c0_15 = arith.constant 0 : index
      %c0_16 = arith.constant 0 : index
      %31 = vector.load %arg14[%c0_15, %c0_16] : memref<1x32xf32, #tpu.memory_space<vmem>>, vector<1x32xf32>
      tpu.vector_store %arg14[%c0_15, %c0_16], %30 {strides = array<i32>} : memref<1x32xf32, #tpu.memory_space<vmem>>, vector<1x32xf32>,
    } else {
    }
    %c1_i32 = arith.constant 1 : i32
    %10 = arith.cmpi eq, %arg0, %c1_i32 : i32
    %11 = arith.extui %10 : i1 to i32
    %c0_i32_4 = arith.constant 0 : i32
    %12 = arith.cmpi ne, %11, %c0_i32_4 : i32
    scf.if %12 {
      %22 = arith.index_cast %1 : i32 to index
      %c0 = arith.constant 0 : index
      %23 = vector.load %arg12[%22, %c0] : memref<8x32xf32, #tpu.memory_space<vmem>>, vector<8x32xf32>
      %c0_8 = arith.constant 0 : index
      %c0_9 = arith.constant 0 : index
      %24 = vector.load %arg14[%c0_8, %c0_9] : memref<1x32xf32, #tpu.memory_space<vmem>>, vector<1x32xf32>
      %cst = arith.constant 1.250000e-01 : f32
      %25 = vector.broadcast %cst : f32 to vector<1x32xf32>
      %26 = arith.mulf %24, %25 : vector<1x32xf32>
      %27 = vector.broadcast %26 : vector<1x32xf32> to vector<8x32xf32>
      %28 = arith.subf %23, %27 : vector<8x32xf32>
      %c0_10 = arith.constant 0 : index
      %c0_11 = arith.constant 0 : index
      %29 = vector.load %arg15[%c0_10, %c0_11] : memref<1x32xf32, #tpu.memory_space<vmem>>, vector<1x32xf32>
      %30 = arith.mulf %28, %28 : vector<8x32xf32>
      %cst_12 = arith.constant dense<0.000000e+00> : vector<32xf32>
      %31 = vector.multi_reduction <add>, %30, %cst_12 [0] : vector<8x32xf32> to vector<32xf32>
      %32 = vector.shape_cast %31 : vector<32xf32> to vector<1x32xf32>
      %33 = arith.addf %29, %32 : vector<1x32xf32>
      %c0_13 = arith.constant 0 : index
      %c0_14 = arith.constant 0 : index
      %34 = vector.load %arg15[%c0_13, %c0_14] : memref<1x32xf32, #tpu.memory_space<vmem>>, vector<1x32xf32>
      tpu.vector_store %arg15[%c0_13, %c0_14], %33 {strides = array<i32>} : memref<1x32xf32, #tpu.memory_space<vmem>>, vector<1x32xf32>,
    } else {
    }
    %c2_i32 = arith.constant 2 : i32
    %13 = arith.cmpi eq, %arg0, %c2_i32 : i32
    %14 = arith.extui %13 : i1 to i32
    %c0_i32_5 = arith.constant 0 : i32
    %15 = arith.cmpi ne, %14, %c0_i32_5 : i32
    scf.if %15 {
      %c0_i32_8 = arith.constant 0 : i32
      %22 = arith.cmpi eq, %arg1, %c0_i32_8 : i32
      %23 = arith.extui %22 : i1 to i32
      %c0_i32_9 = arith.constant 0 : i32
      %24 = arith.cmpi ne, %23, %c0_i32_9 : i32
      scf.if %24 {
        %c0_24 = arith.constant 0 : index
        %c0_25 = arith.constant 0 : index
        %47 = vector.load %arg14[%c0_24, %c0_25] : memref<1x32xf32, #tpu.memory_space<vmem>>, vector<1x32xf32>
        %cst_26 = arith.constant 1.250000e-01 : f32
        %48 = vector.broadcast %cst_26 : f32 to vector<1x32xf32>
        %49 = arith.mulf %47, %48 : vector<1x32xf32>
        %c0_27 = arith.constant 0 : index
        %c0_28 = arith.constant 0 : index
        %50 = vector.load %arg15[%c0_27, %c0_28] : memref<1x32xf32, #tpu.memory_space<vmem>>, vector<1x32xf32>
        %cst_29 = arith.constant 1.250000e-01 : f32
        %51 = vector.broadcast %cst_29 : f32 to vector<1x32xf32>
        %52 = arith.mulf %50, %51 : vector<1x32xf32>
        %c0_30 = arith.constant 0 : index
        %c0_31 = arith.constant 0 : index
        %53 = vector.load %arg4[%c0_30, %c0_31] : memref<1x32xf32, #tpu.memory_space<vmem>>, vector<1x32xf32>
        %cst_32 = arith.constant 9.99999974E-6 : f32
        %54 = vector.broadcast %cst_32 : f32 to vector<1x32xf32>
        %55 = arith.addf %52, %54 : vector<1x32xf32>
        %56 = math.rsqrt %55 : vector<1x32xf32>
        %57 = arith.mulf %53, %56 : vector<1x32xf32>
        %c0_33 = arith.constant 0 : index
        %c0_34 = arith.constant 0 : index
        %58 = vector.load %arg18[%c0_33, %c0_34] : memref<1x32xf32, #tpu.memory_space<vmem>>, vector<1x32xf32>
        tpu.vector_store %arg18[%c0_33, %c0_34], %57 {strides = array<i32>} : memref<1x32xf32, #tpu.memory_space<vmem>>, vector<1x32xf32>,
        %c0_35 = arith.constant 0 : index
        %c0_36 = arith.constant 0 : index
        %59 = vector.load %arg5[%c0_35, %c0_36] : memref<1x32xf32, #tpu.memory_space<vmem>>, vector<1x32xf32>
        %c0_37 = arith.constant 0 : index
        %c0_38 = arith.constant 0 : index
        %60 = vector.load %arg18[%c0_37, %c0_38] : memref<1x32xf32, #tpu.memory_space<vmem>>, vector<1x32xf32>
        %61 = arith.mulf %49, %60 : vector<1x32xf32>
        %62 = arith.subf %59, %61 : vector<1x32xf32>
        %c0_39 = arith.constant 0 : index
        %c0_40 = arith.constant 0 : index
        %63 = vector.load %arg19[%c0_39, %c0_40] : memref<1x32xf32, #tpu.memory_space<vmem>>, vector<1x32xf32>
        tpu.vector_store %arg19[%c0_39, %c0_40], %62 {strides = array<i32>} : memref<1x32xf32, #tpu.memory_space<vmem>>, vector<1x32xf32>,
      } else {
      }
      %25 = arith.index_cast %1 : i32 to index
      %c0 = arith.constant 0 : index
      %26 = vector.load %arg12[%25, %c0] : memref<8x32xf32, #tpu.memory_space<vmem>>, vector<8x32xf32>
      %c0_10 = arith.constant 0 : index
      %c0_11 = arith.constant 0 : index
      %27 = vector.load %arg18[%c0_10, %c0_11] : memref<1x32xf32, #tpu.memory_space<vmem>>, vector<1x32xf32>
      %28 = vector.broadcast %27 : vector<1x32xf32> to vector<8x32xf32>
      %29 = arith.mulf %26, %28 : vector<8x32xf32>
      %c0_12 = arith.constant 0 : index
      %c0_13 = arith.constant 0 : index
      %30 = vector.load %arg19[%c0_12, %c0_13] : memref<1x32xf32, #tpu.memory_space<vmem>>, vector<1x32xf32>
      %31 = vector.broadcast %30 : vector<1x32xf32> to vector<8x32xf32>
      %32 = arith.addf %29, %31 : vector<8x32xf32>
      %cst = arith.constant 0.000000e+00 : f32
      %33 = vector.broadcast %cst : f32 to vector<8x32xf32>
      %34 = arith.cmpf ogt, %32, %33 : vector<8x32xf32>
      %cst_14 = arith.constant 0.00999999977 : f32
      %35 = vector.broadcast %cst_14 : f32 to vector<8x32xf32>
      %36 = arith.mulf %35, %32 : vector<8x32xf32>
      %37 = arith.select %34, %32, %36 : vector<8x32xi1>, vector<8x32xf32>
      %c0_15 = arith.constant 0 : index
      %c0_16 = arith.constant 0 : index
      %38 = vector.load %arg6[%c0_15, %c0_16] : memref<32x16xf32, #tpu.memory_space<vmem>>, vector<32x16xf32>
      %cst_17 = arith.constant dense<0.000000e+00> : vector<8x16xf32>
      %39 = tpu.matmul %37, %38, %cst_17 {dimension_numbers = #tpu.dot_dimension_numbers<[1], [0], [0], [1], [0, 0, 1, 1], [], []>} : vector<8x32xf32>, vector<32x16xf32>, vector<8x16xf32> -> vector<8x16xf32>
      %40 = arith.index_cast %1 : i32 to index
      %c0_18 = arith.constant 0 : index
      %41 = vector.load %arg13[%40, %c0_18] : memref<8x16xf32, #tpu.memory_space<vmem>>, vector<8x16xf32>
      tpu.vector_store %arg13[%40, %c0_18], %39 {strides = array<i32>} : memref<8x16xf32, #tpu.memory_space<vmem>>, vector<8x16xf32>,
      %c0_19 = arith.constant 0 : index
      %c0_20 = arith.constant 0 : index
      %42 = vector.load %arg16[%c0_19, %c0_20] : memref<1x16xf32, #tpu.memory_space<vmem>>, vector<1x16xf32>
      %cst_21 = arith.constant dense<0.000000e+00> : vector<16xf32>
      %43 = vector.multi_reduction <add>, %39, %cst_21 [0] : vector<8x16xf32> to vector<16xf32>
      %44 = vector.shape_cast %43 : vector<16xf32> to vector<1x16xf32>
      %45 = arith.addf %42, %44 : vector<1x16xf32>
      %c0_22 = arith.constant 0 : index
      %c0_23 = arith.constant 0 : index
      %46 = vector.load %arg16[%c0_22, %c0_23] : memref<1x16xf32, #tpu.memory_space<vmem>>, vector<1x16xf32>
      tpu.vector_store %arg16[%c0_22, %c0_23], %45 {strides = array<i32>} : memref<1x16xf32, #tpu.memory_space<vmem>>, vector<1x16xf32>,
    } else {
    }
    %c3_i32 = arith.constant 3 : i32
    %16 = arith.cmpi eq, %arg0, %c3_i32 : i32
    %17 = arith.extui %16 : i1 to i32
    %c0_i32_6 = arith.constant 0 : i32
    %18 = arith.cmpi ne, %17, %c0_i32_6 : i32
    scf.if %18 {
      %22 = arith.index_cast %1 : i32 to index
      %c0 = arith.constant 0 : index
      %23 = vector.load %arg13[%22, %c0] : memref<8x16xf32, #tpu.memory_space<vmem>>, vector<8x16xf32>
      %c0_8 = arith.constant 0 : index
      %c0_9 = arith.constant 0 : index
      %24 = vector.load %arg16[%c0_8, %c0_9] : memref<1x16xf32, #tpu.memory_space<vmem>>, vector<1x16xf32>
      %cst = arith.constant 1.250000e-01 : f32
      %25 = vector.broadcast %cst : f32 to vector<1x16xf32>
      %26 = arith.mulf %24, %25 : vector<1x16xf32>
      %27 = vector.broadcast %26 : vector<1x16xf32> to vector<8x16xf32>
      %28 = arith.subf %23, %27 : vector<8x16xf32>
      %c0_10 = arith.constant 0 : index
      %c0_11 = arith.constant 0 : index
      %29 = vector.load %arg17[%c0_10, %c0_11] : memref<1x16xf32, #tpu.memory_space<vmem>>, vector<1x16xf32>
      %30 = arith.mulf %28, %28 : vector<8x16xf32>
      %cst_12 = arith.constant dense<0.000000e+00> : vector<16xf32>
      %31 = vector.multi_reduction <add>, %30, %cst_12 [0] : vector<8x16xf32> to vector<16xf32>
      %32 = vector.shape_cast %31 : vector<16xf32> to vector<1x16xf32>
      %33 = arith.addf %29, %32 : vector<1x16xf32>
      %c0_13 = arith.constant 0 : index
      %c0_14 = arith.constant 0 : index
      %34 = vector.load %arg17[%c0_13, %c0_14] : memref<1x16xf32, #tpu.memory_space<vmem>>, vector<1x16xf32>
      tpu.vector_store %arg17[%c0_13, %c0_14], %33 {strides = array<i32>} : memref<1x16xf32, #tpu.memory_space<vmem>>, vector<1x16xf32>,
    } else {
    }
    %c4_i32 = arith.constant 4 : i32
    %19 = arith.cmpi eq, %arg0, %c4_i32 : i32
    %20 = arith.extui %19 : i1 to i32
    %c0_i32_7 = arith.constant 0 : i32
    %21 = arith.cmpi ne, %20, %c0_i32_7 : i32
    scf.if %21 {
      %c0_i32_8 = arith.constant 0 : i32
      %22 = arith.cmpi eq, %arg1, %c0_i32_8 : i32
      %23 = arith.extui %22 : i1 to i32
      %c0_i32_9 = arith.constant 0 : i32
      %24 = arith.cmpi ne, %23, %c0_i32_9 : i32
      scf.if %24 {
        %c0_22 = arith.constant 0 : index
        %c0_23 = arith.constant 0 : index
        %44 = vector.load %arg16[%c0_22, %c0_23] : memref<1x16xf32, #tpu.memory_space<vmem>>, vector<1x16xf32>
        %cst_24 = arith.constant 1.250000e-01 : f32
        %45 = vector.broadcast %cst_24 : f32 to vector<1x16xf32>
        %46 = arith.mulf %44, %45 : vector<1x16xf32>
        %c0_25 = arith.constant 0 : index
        %c0_26 = arith.constant 0 : index
        %47 = vector.load %arg17[%c0_25, %c0_26] : memref<1x16xf32, #tpu.memory_space<vmem>>, vector<1x16xf32>
        %cst_27 = arith.constant 1.250000e-01 : f32
        %48 = vector.broadcast %cst_27 : f32 to vector<1x16xf32>
        %49 = arith.mulf %47, %48 : vector<1x16xf32>
        %c0_28 = arith.constant 0 : index
        %c0_29 = arith.constant 0 : index
        %50 = vector.load %arg7[%c0_28, %c0_29] : memref<1x16xf32, #tpu.memory_space<vmem>>, vector<1x16xf32>
        %cst_30 = arith.constant 9.99999974E-6 : f32
        %51 = vector.broadcast %cst_30 : f32 to vector<1x16xf32>
        %52 = arith.addf %49, %51 : vector<1x16xf32>
        %53 = math.rsqrt %52 : vector<1x16xf32>
        %54 = arith.mulf %50, %53 : vector<1x16xf32>
        %c0_31 = arith.constant 0 : index
        %c0_32 = arith.constant 0 : index
        %55 = vector.load %arg20[%c0_31, %c0_32] : memref<1x16xf32, #tpu.memory_space<vmem>>, vector<1x16xf32>
        tpu.vector_store %arg20[%c0_31, %c0_32], %54 {strides = array<i32>} : memref<1x16xf32, #tpu.memory_space<vmem>>, vector<1x16xf32>,
        %c0_33 = arith.constant 0 : index
        %c0_34 = arith.constant 0 : index
        %56 = vector.load %arg8[%c0_33, %c0_34] : memref<1x16xf32, #tpu.memory_space<vmem>>, vector<1x16xf32>
        %c0_35 = arith.constant 0 : index
        %c0_36 = arith.constant 0 : index
        %57 = vector.load %arg20[%c0_35, %c0_36] : memref<1x16xf32, #tpu.memory_space<vmem>>, vector<1x16xf32>
        %58 = arith.mulf %46, %57 : vector<1x16xf32>
        %59 = arith.subf %56, %58 : vector<1x16xf32>
        %c0_37 = arith.constant 0 : index
        %c0_38 = arith.constant 0 : index
        %60 = vector.load %arg21[%c0_37, %c0_38] : memref<1x16xf32, #tpu.memory_space<vmem>>, vector<1x16xf32>
        tpu.vector_store %arg21[%c0_37, %c0_38], %59 {strides = array<i32>} : memref<1x16xf32, #tpu.memory_space<vmem>>, vector<1x16xf32>,
      } else {
      }
      %25 = arith.index_cast %1 : i32 to index
      %c0 = arith.constant 0 : index
      %26 = vector.load %arg13[%25, %c0] : memref<8x16xf32, #tpu.memory_space<vmem>>, vector<8x16xf32>
      %c0_10 = arith.constant 0 : index
      %c0_11 = arith.constant 0 : index
      %27 = vector.load %arg20[%c0_10, %c0_11] : memref<1x16xf32, #tpu.memory_space<vmem>>, vector<1x16xf32>
      %28 = vector.broadcast %27 : vector<1x16xf32> to vector<8x16xf32>
      %29 = arith.mulf %26, %28 : vector<8x16xf32>
      %c0_12 = arith.constant 0 : index
      %c0_13 = arith.constant 0 : index
      %30 = vector.load %arg21[%c0_12, %c0_13] : memref<1x16xf32, #tpu.memory_space<vmem>>, vector<1x16xf32>
      %31 = vector.broadcast %30 : vector<1x16xf32> to vector<8x16xf32>
      %32 = arith.addf %29, %31 : vector<8x16xf32>
      %cst = arith.constant 0.000000e+00 : f32
      %33 = vector.broadcast %cst : f32 to vector<8x16xf32>
      %34 = arith.cmpf ogt, %32, %33 : vector<8x16xf32>
      %cst_14 = arith.constant 0.00999999977 : f32
      %35 = vector.broadcast %cst_14 : f32 to vector<8x16xf32>
      %36 = arith.mulf %35, %32 : vector<8x16xf32>
      %37 = arith.select %34, %32, %36 : vector<8x16xi1>, vector<8x16xf32>
      %c0_15 = arith.constant 0 : index
      %c0_16 = arith.constant 0 : index
      %38 = vector.load %arg9[%c0_15, %c0_16] : memref<16x10xf32, #tpu.memory_space<vmem>>, vector<16x10xf32>
      %cst_17 = arith.constant dense<0.000000e+00> : vector<8x10xf32>
      %39 = tpu.matmul %37, %38, %cst_17 {dimension_numbers = #tpu.dot_dimension_numbers<[1], [0], [0], [1], [0, 0, 1, 1], [], []>} : vector<8x16xf32>, vector<16x10xf32>, vector<8x10xf32> -> vector<8x10xf32>
      %c0_18 = arith.constant 0 : index
      %c0_19 = arith.constant 0 : index
      %40 = vector.load %arg10[%c0_18, %c0_19] : memref<1x10xf32, #tpu.memory_space<vmem>>, vector<1x10xf32>
      %41 = vector.broadcast %40 : vector<1x10xf32> to vector<8x10xf32>
      %42 = arith.addf %39, %41 : vector<8x10xf32>
      %c0_20 = arith.constant 0 : index
      %c0_21 = arith.constant 0 : index
      %43 = vector.load %arg11[%c0_20, %c0_21] : memref<8x10xf32, #tpu.memory_space<vmem>>, vector<8x10xf32>
      tpu.vector_store %arg11[%c0_20, %c0_21], %42 {strides = array<i32>} : memref<8x10xf32, #tpu.memory_space<vmem>>, vector<8x10xf32>,
    } else {
    }
    return
  }
  func.func @transform_0(%arg0: i32, %arg1: i32) -> (i32, i32) {
    %c0_i32 = arith.constant 0 : i32
    %0 = arith.cmpi eq, %arg0, %c0_i32 : i32
    %c0_i32_0 = arith.constant 0 : i32
    %1 = arith.select %0, %arg1, %c0_i32_0 : i32
    %c0_i32_1 = arith.constant 0 : i32
    %c0_i32_2 = arith.constant 0 : i32
    return %1, %c0_i32_1 : i32, i32
  }
  func.func @transform_1(%arg0: i32, %arg1: i32) -> (i32, i32) {
    %c0_i32 = arith.constant 0 : i32
    %c0_i32_0 = arith.constant 0 : i32
    %c0_i32_1 = arith.constant 0 : i32
    return %c0_i32, %c0_i32_0 : i32, i32
  }
  func.func @transform_2(%arg0: i32, %arg1: i32) -> (i32, i32) {
    %c0_i32 = arith.constant 0 : i32
    %c0_i32_0 = arith.constant 0 : i32
    %c0_i32_1 = arith.constant 0 : i32
    return %c0_i32, %c0_i32_0 : i32, i32
  }
  func.func @transform_3(%arg0: i32, %arg1: i32) -> (i32, i32) {
    %c0_i32 = arith.constant 0 : i32
    %c0_i32_0 = arith.constant 0 : i32
    %c0_i32_1 = arith.constant 0 : i32
    return %c0_i32, %c0_i32_0 : i32, i32
  }
  func.func @transform_4(%arg0: i32, %arg1: i32) -> (i32, i32) {
    %c0_i32 = arith.constant 0 : i32
    %c0_i32_0 = arith.constant 0 : i32
    %c0_i32_1 = arith.constant 0 : i32
    return %c0_i32, %c0_i32_0 : i32, i32
  }
  func.func @transform_5(%arg0: i32, %arg1: i32) -> (i32, i32) {
    %c0_i32 = arith.constant 0 : i32
    %c0_i32_0 = arith.constant 0 : i32
    %c0_i32_1 = arith.constant 0 : i32
    return %c0_i32, %c0_i32_0 : i32, i32
  }
  func.func @transform_6(%arg0: i32, %arg1: i32) -> (i32, i32) {
    %c0_i32 = arith.constant 0 : i32
    %c0_i32_0 = arith.constant 0 : i32
    %c0_i32_1 = arith.constant 0 : i32
    return %c0_i32, %c0_i32_0 : i32, i32
  }
  func.func @transform_7(%arg0: i32, %arg1: i32) -> (i32, i32) {
    %c0_i32 = arith.constant 0 : i32
    %c0_i32_0 = arith.constant 0 : i32
    %c0_i32_1 = arith.constant 0 : i32
    return %c0_i32, %c0_i32_0 : i32, i32
  }
  func.func @transform_8(%arg0: i32, %arg1: i32) -> (i32, i32) {
    %c0_i32 = arith.constant 0 : i32
    %c0_i32_0 = arith.constant 0 : i32
    %c0_i32_1 = arith.constant 0 : i32
    return %c0_i32, %c0_i32_0 : i32, i32
  }
  func.func @transform_9(%arg0: i32, %arg1: i32) -> (i32, i32) {
    %c4_i32 = arith.constant 4 : i32
    %0 = arith.cmpi eq, %arg0, %c4_i32 : i32
    %c0_i32 = arith.constant 0 : i32
    %1 = arith.select %0, %arg1, %c0_i32 : i32
    %c0_i32_0 = arith.constant 0 : i32
    %c0_i32_1 = arith.constant 0 : i32
    return %1, %c0_i32_0 : i32, i32
  }
}

</mosaic_0001>

<llo_original>
// kernel: simplenet_forward.1
$region0: #{simplenet_forward.1}
  #allocation0 [shape = 'u32[]', space=smem, size = 0x4, offset = 0x4, fixed_abs, tag = 'smem constant byte address 0x4 - core index']
  #allocation1 [shape = 'u32[144,128]{1,0:T(1,128)}', space=vmem, size = 0x12000, scoped, tag = 'internal scratch']
  #allocation2 [shape = 'f32[8,32]{1,0:T(8,128)}', space=vmem, size = 0x1000, scoped, tag = 'scratch operand']
  #allocation3 [shape = 'f32[8,16]{1,0:T(8,128)}', space=vmem, size = 0x1000, scoped, tag = 'scratch operand']
  #allocation4 [shape = 'f32[1,32]{1,0:T(1,128)}', space=vmem, size = 0x200, scoped, tag = 'scratch operand']
  #allocation5 [shape = 'f32[1,32]{1,0:T(1,128)}', space=vmem, size = 0x200, scoped, tag = 'scratch operand']
  #allocation6 [shape = 'f32[1,16]{1,0:T(1,128)}', space=vmem, size = 0x200, scoped, tag = 'scratch operand']
  #allocation7 [shape = 'f32[1,16]{1,0:T(1,128)}', space=vmem, size = 0x200, scoped, tag = 'scratch operand']
  #allocation8 [shape = 'f32[1,32]{1,0:T(1,128)}', space=vmem, size = 0x200, scoped, tag = 'scratch operand']
  #allocation9 [shape = 'f32[1,32]{1,0:T(1,128)}', space=vmem, size = 0x200, scoped, tag = 'scratch operand']
  #allocation10 [shape = 'f32[1,16]{1,0:T(1,128)}', space=vmem, size = 0x200, scoped, tag = 'scratch operand']
  #allocation11 [shape = 'f32[1,16]{1,0:T(1,128)}', space=vmem, size = 0x200, scoped, tag = 'scratch operand']
  %s0 = inlined_call_operand.vmem [shape: f32[8,64], index: 0, kind: input, shape index: {}]
  %s1 = inlined_call_operand.vmem [shape: f32[64,32], index: 1, kind: input, shape index: {}]
  %s2 = inlined_call_operand.vmem [shape: f32[1,32], index: 2, kind: input, shape index: {}]
  %s3 = inlined_call_operand.vmem [shape: f32[1,32], index: 3, kind: input, shape index: {}]
  %s4 = inlined_call_operand.vmem [shape: f32[32,16], index: 4, kind: input, shape index: {}]
  %s5 = inlined_call_operand.vmem [shape: f32[1,16], index: 5, kind: input, shape index: {}]
  %s6 = inlined_call_operand.vmem [shape: f32[1,16], index: 6, kind: input, shape index: {}]
  %s7 = inlined_call_operand.vmem [shape: f32[16,10], index: 7, kind: input, shape index: {}]
  %s8 = inlined_call_operand.vmem [shape: f32[1,10], index: 8, kind: input, shape index: {}]
  %s9 = inlined_call_operand.hbm [shape: f32[8,10], index: 9, kind: output, shape index: {}]
  %s10 = sld [smem:[#allocation0]]
  $region101: #{simplenet_forward.1} parent=0
    _
  %s12 = ssub.s32 1, %s10
  %s13 = scalar_select 0, %s12, %s10
  $region1: #{simplenet_forward.1} parent=0
    #allocation12 [shape = 'u8[8192]{0}', space=vmem, size = 0x2000, scoped, tag = 'output window, operand 0']
    #allocation13 [shape = 's32[2]{0}', space=sflag, size = 0x8, scoped, tag = 'scoped memory for simplenet_forward.1']
    %14 = vsyncpa [#allocation13], 0
    %s15 = scalar_lea.sflag [#allocation13], 1
    %16 = vsyncpa %s15, 0
    loop: start=0, step=1, limit=7
    $region2: #{simplenet_forward.1} parent=1 // loop_pre_header
      _
    $region3: #{simplenet_forward.1} parent=1 // loop_header
      %s18 = sphi 0, %s22
      %p19 = scmp.ge.s32.totalorder %s18, 7
      %s25 = sphi 0, %s37
      %s26 = sphi 0, %s33
      %s27 = sphi 0, %s25
      %s28 = sphi 0, %s26
      %s29 = sphi 0, %s27
      %s30 = sphi 0, %s28
      %s44 = sphi 0, %s46
      %s47 = sphi 0, %s44
      %s48 = sphi 0, %s47
      %s64 = sphi 0, %s48
      %s68 = sphi 0, %s68
      %s70 = sphi 0, %s68
      %s71 = sphi 0, %s70
      %s85 = sphi 0, %s71
      %s89 = sphi 0, %s89
      %s91 = sphi 0, %s89
      %s92 = sphi 0, %s91
      %s106 = sphi 0, %s92
      %s110 = sphi 0, %s110
      %s112 = sphi 0, %s110
      %s113 = sphi 0, %s112
      %s127 = sphi 0, %s113
      %s131 = sphi 0, %s131
      %s133 = sphi 0, %s131
      %s134 = sphi 0, %s133
      %s148 = sphi 0, %s134
      %s152 = sphi 0, %s152
      %s154 = sphi 0, %s152
      %s155 = sphi 0, %s154
      %s169 = sphi 0, %s155
      %s173 = sphi 0, %s173
      %s175 = sphi 0, %s173
      %s176 = sphi 0, %s175
      %s190 = sphi 0, %s176
      %s194 = sphi 0, %s194
      %s196 = sphi 0, %s194
      %s197 = sphi 0, %s196
      %s211 = sphi 0, %s197
      %s215 = sphi 0, %s215
      %s217 = sphi 0, %s215
      %s218 = sphi 0, %s217
      %s232 = sphi 0, %s218
      %s242 = sphi 0, %s244
      %s245 = sphi 0, %s242
      %s246 = sphi 0, %s245
      %s262 = sphi 0, %s246
    $region4: #{simplenet_forward.1} parent=1 // loop_header_branch
      %21 = sbr.rel (%p19) target = $region8
    $region5: #{simplenet_forward.1} parent=1 // loop_body
      %s23 = ssub.s32 %s18, 1
      %s24 = ssub.s32 %s18, 2
      %s31 = sadd.s32 1, %s26
      %p32 = scmp.ge.s32.totalorder %s31, 1
      %s33 = scalar_select %p32, 0, %s31
      %s34 = sadd.s32 1, %s25
      %s35 = scalar_select %p32, %s34, %s25
      %p36 = scmp.ge.s32.totalorder %s35, 5
      %s37 = scalar_select %p36, 0, %s35
      %p38 = scmp.eq.s32.totalorder %s25, 0
      %s39 = scalar_select %p38, %s26, 0
      %p40 = scmp.eq.s32.totalorder %s37, 0
      %s41 = scalar_select %p40, %s33, 0
      %s42 = ssub.s32 %s39, %s41
      %p43 = scmp.eq.s32.totalorder %s42, 0
      %s45 = sadd.s32 %s44, 1
      %s46 = scalar_select %p43, %s44, %s45
      %p49 = pneg %p43
      %p50 = scmp.eq.s32.totalorder %s18, 4
      %p51 = por %p49, %p50
      %p52 = scmp.ne.s32.totalorder %s44, %s47
      %p53 = scmp.eq.s32.totalorder %s18, 0
      %p54 = por %p52, %p53
      %p55 = scmp.ne.s32.totalorder %s44, %s47
      %p56 = scmp.eq.s32.totalorder %s23, 4
      %p57 = por %p55, %p56
      %p58 = scmp.ne.s32.totalorder %s47, %s48
      %p59 = scmp.eq.s32.totalorder %s23, 0
      %p60 = por %p58, %p59
      %p61 = scmp.ne.s32.totalorder %s47, %s48
      %p62 = scmp.eq.s32.totalorder %s24, 4
      %p63 = por %p61, %p62
      %p65 = scmp.ne.s32.totalorder %s48, %s64
      %p66 = scmp.eq.s32.totalorder %s24, 0
      %p67 = por %p65, %p66
      %s69 = sadd.s32 %s68, 1
      %p72 = scmp.eq.s32.totalorder %s18, 4
      %p73 = scmp.ne.s32.totalorder %s68, %s70
      %p74 = scmp.eq.s32.totalorder %s18, 0
      %p75 = por %p73, %p74
      %p76 = scmp.ne.s32.totalorder %s68, %s70
      %p77 = scmp.eq.s32.totalorder %s23, 4
      %p78 = por %p76, %p77
      %p79 = scmp.ne.s32.totalorder %s70, %s71
      %p80 = scmp.eq.s32.totalorder %s23, 0
      %p81 = por %p79, %p80
      %p82 = scmp.ne.s32.totalorder %s70, %s71
      %p83 = scmp.eq.s32.totalorder %s24, 4
      %p84 = por %p82, %p83
      %p86 = scmp.ne.s32.totalorder %s71, %s85
      %p87 = scmp.eq.s32.totalorder %s24, 0
      %p88 = por %p86, %p87
      %s90 = sadd.s32 %s89, 1
      %p93 = scmp.eq.s32.totalorder %s18, 4
      %p94 = scmp.ne.s32.totalorder %s89, %s91
      %p95 = scmp.eq.s32.totalorder %s18, 0
      %p96 = por %p94, %p95
      %p97 = scmp.ne.s32.totalorder %s89, %s91
      %p98 = scmp.eq.s32.totalorder %s23, 4
      %p99 = por %p97, %p98
      %p100 = scmp.ne.s32.totalorder %s91, %s92
      %p101 = scmp.eq.s32.totalorder %s23, 0
      %p102 = por %p100, %p101
      %p103 = scmp.ne.s32.totalorder %s91, %s92
      %p104 = scmp.eq.s32.totalorder %s24, 4
      %p105 = por %p103, %p104
      %p107 = scmp.ne.s32.totalorder %s92, %s106
      %p108 = scmp.eq.s32.totalorder %s24, 0
      %p109 = por %p107, %p108
      %s111 = sadd.s32 %s110, 1
      %p114 = scmp.eq.s32.totalorder %s18, 4
      %p115 = scmp.ne.s32.totalorder %s110, %s112
      %p116 = scmp.eq.s32.totalorder %s18, 0
      %p117 = por %p115, %p116
      %p118 = scmp.ne.s32.totalorder %s110, %s112
      %p119 = scmp.eq.s32.totalorder %s23, 4
      %p120 = por %p118, %p119
      %p121 = scmp.ne.s32.totalorder %s112, %s113
      %p122 = scmp.eq.s32.totalorder %s23, 0
      %p123 = por %p121, %p122
      %p124 = scmp.ne.s32.totalorder %s112, %s113
      %p125 = scmp.eq.s32.totalorder %s24, 4
      %p126 = por %p124, %p125
      %p128 = scmp.ne.s32.totalorder %s113, %s127
      %p129 = scmp.eq.s32.totalorder %s24, 0
      %p130 = por %p128, %p129
      %s132 = sadd.s32 %s131, 1
      %p135 = scmp.eq.s32.totalorder %s18, 4
      %p136 = scmp.ne.s32.totalorder %s131, %s133
      %p137 = scmp.eq.s32.totalorder %s18, 0
      %p138 = por %p136, %p137
      %p139 = scmp.ne.s32.totalorder %s131, %s133
      %p140 = scmp.eq.s32.totalorder %s23, 4
      %p141 = por %p139, %p140
      %p142 = scmp.ne.s32.totalorder %s133, %s134
      %p143 = scmp.eq.s32.totalorder %s23, 0
      %p144 = por %p142, %p143
      %p145 = scmp.ne.s32.totalorder %s133, %s134
      %p146 = scmp.eq.s32.totalorder %s24, 4
      %p147 = por %p145, %p146
      %p149 = scmp.ne.s32.totalorder %s134, %s148
      %p150 = scmp.eq.s32.totalorder %s24, 0
      %p151 = por %p149, %p150
      %s153 = sadd.s32 %s152, 1
      %p156 = scmp.eq.s32.totalorder %s18, 4
      %p157 = scmp.ne.s32.totalorder %s152, %s154
      %p158 = scmp.eq.s32.totalorder %s18, 0
      %p159 = por %p157, %p158
      %p160 = scmp.ne.s32.totalorder %s152, %s154
      %p161 = scmp.eq.s32.totalorder %s23, 4
      %p162 = por %p160, %p161
      %p163 = scmp.ne.s32.totalorder %s154, %s155
      %p164 = scmp.eq.s32.totalorder %s23, 0
      %p165 = por %p163, %p164
      %p166 = scmp.ne.s32.totalorder %s154, %s155
      %p167 = scmp.eq.s32.totalorder %s24, 4
      %p168 = por %p166, %p167
      %p170 = scmp.ne.s32.totalorder %s155, %s169
      %p171 = scmp.eq.s32.totalorder %s24, 0
      %p172 = por %p170, %p171
      %s174 = sadd.s32 %s173, 1
      %p177 = scmp.eq.s32.totalorder %s18, 4
      %p178 = scmp.ne.s32.totalorder %s173, %s175
      %p179 = scmp.eq.s32.totalorder %s18, 0
      %p180 = por %p178, %p179
      %p181 = scmp.ne.s32.totalorder %s173, %s175
      %p182 = scmp.eq.s32.totalorder %s23, 4
      %p183 = por %p181, %p182
      %p184 = scmp.ne.s32.totalorder %s175, %s176
      %p185 = scmp.eq.s32.totalorder %s23, 0
      %p186 = por %p184, %p185
      %p187 = scmp.ne.s32.totalorder %s175, %s176
      %p188 = scmp.eq.s32.totalorder %s24, 4
      %p189 = por %p187, %p188
      %p191 = scmp.ne.s32.totalorder %s176, %s190
      %p192 = scmp.eq.s32.totalorder %s24, 0
      %p193 = por %p191, %p192
      %s195 = sadd.s32 %s194, 1
      %p198 = scmp.eq.s32.totalorder %s18, 4
      %p199 = scmp.ne.s32.totalorder %s194, %s196
      %p200 = scmp.eq.s32.totalorder %s18, 0
      %p201 = por %p199, %p200
      %p202 = scmp.ne.s32.totalorder %s194, %s196
      %p203 = scmp.eq.s32.totalorder %s23, 4
      %p204 = por %p202, %p203
      %p205 = scmp.ne.s32.totalorder %s196, %s197
      %p206 = scmp.eq.s32.totalorder %s23, 0
      %p207 = por %p205, %p206
      %p208 = scmp.ne.s32.totalorder %s196, %s197
      %p209 = scmp.eq.s32.totalorder %s24, 4
      %p210 = por %p208, %p209
      %p212 = scmp.ne.s32.totalorder %s197, %s211
      %p213 = scmp.eq.s32.totalorder %s24, 0
      %p214 = por %p212, %p213
      %s216 = sadd.s32 %s215, 1
      %p219 = scmp.eq.s32.totalorder %s18, 4
      %p220 = scmp.ne.s32.totalorder %s215, %s217
      %p221 = scmp.eq.s32.totalorder %s18, 0
      %p222 = por %p220, %p221
      %p223 = scmp.ne.s32.totalorder %s215, %s217
      %p224 = scmp.eq.s32.totalorder %s23, 4
      %p225 = por %p223, %p224
      %p226 = scmp.ne.s32.totalorder %s217, %s218
      %p227 = scmp.eq.s32.totalorder %s23, 0
      %p228 = por %p226, %p227
      %p229 = scmp.ne.s32.totalorder %s217, %s218
      %p230 = scmp.eq.s32.totalorder %s24, 4
      %p231 = por %p229, %p230
      %p233 = scmp.ne.s32.totalorder %s218, %s232
      %p234 = scmp.eq.s32.totalorder %s24, 0
      %p235 = por %p233, %p234
      %p236 = scmp.eq.s32.totalorder %s25, 4
      %s237 = scalar_select %p236, %s26, 0
      %p238 = scmp.eq.s32.totalorder %s37, 4
      %s239 = scalar_select %p238, %s33, 0
      %s240 = ssub.s32 %s237, %s239
      %p241 = scmp.eq.s32.totalorder %s240, 0
      %s243 = sadd.s32 %s242, 1
      %s244 = scalar_select %p241, %s242, %s243
      %p247 = pneg %p241
      %p248 = scmp.eq.s32.totalorder %s18, 4
      %p249 = por %p247, %p248
      %p250 = scmp.ne.s32.totalorder %s242, %s245
      %p251 = scmp.eq.s32.totalorder %s18, 0
      %p252 = por %p250, %p251
      %p253 = scmp.ne.s32.totalorder %s242, %s245
      %p254 = scmp.eq.s32.totalorder %s23, 4
      %p255 = por %p253, %p254
      %p256 = scmp.ne.s32.totalorder %s245, %s246
      %p257 = scmp.eq.s32.totalorder %s23, 0
      %p258 = por %p256, %p257
      %p259 = scmp.ne.s32.totalorder %s245, %s246
      %p260 = scmp.eq.s32.totalorder %s24, 4
      %p261 = por %p259, %p260
      %p263 = scmp.ne.s32.totalorder %s246, %s262
      %p264 = scmp.eq.s32.totalorder %s24, 0
      %p265 = por %p263, %p264
      %p266 = scmp.le.s32.totalorder 1, %s18
      %p267 = scmp.lt.s32.totalorder %s18, 6
      %p268 = pnand %p266, %p267
      %p269 = pneg %p268
      // Predicated region
      $region9: #{simplenet_forward.1} parent=5 // pred_check
        _
      $region10: #{simplenet_forward.1} parent=5 // pred_check_branch
        %271 = sbr.rel (%p268) target = $region12
      $region11: #{simplenet_forward.1} parent=5 // pred_region
        %s272 = ssub.s32 %s18, 1
        // Predicated region
        $region13: #{simplenet_forward.1} parent=11 // pred_check
          %p273 = pneg %p81
        $region14: #{simplenet_forward.1} parent=11 // pred_check_branch
          %275 = sbr.rel (%p273) target = $region16
        $region15: #{simplenet_forward.1} parent=11 // pred_region
          _
        $region16: #{simplenet_forward.1} parent=11 // pred_fallthru
          _
        // Predicated region
        $region17: #{simplenet_forward.1} parent=11 // pred_check
          %p276 = pneg %p102
        $region18: #{simplenet_forward.1} parent=11 // pred_check_branch
          %278 = sbr.rel (%p276) target = $region20
        $region19: #{simplenet_forward.1} parent=11 // pred_region
          _
        $region20: #{simplenet_forward.1} parent=11 // pred_fallthru
          _
        // Predicated region
        $region21: #{simplenet_forward.1} parent=11 // pred_check
          %p279 = pneg %p123
        $region22: #{simplenet_forward.1} parent=11 // pred_check_branch
          %281 = sbr.rel (%p279) target = $region24
        $region23: #{simplenet_forward.1} parent=11 // pred_region
          _
        $region24: #{simplenet_forward.1} parent=11 // pred_fallthru
          _
        // Predicated region
        $region25: #{simplenet_forward.1} parent=11 // pred_check
          %p282 = pneg %p144
        $region26: #{simplenet_forward.1} parent=11 // pred_check_branch
          %284 = sbr.rel (%p282) target = $region28
        $region27: #{simplenet_forward.1} parent=11 // pred_region
          _
        $region28: #{simplenet_forward.1} parent=11 // pred_fallthru
          _
        // Predicated region
        $region29: #{simplenet_forward.1} parent=11 // pred_check
          %p285 = pneg %p165
        $region30: #{simplenet_forward.1} parent=11 // pred_check_branch
          %287 = sbr.rel (%p285) target = $region32
        $region31: #{simplenet_forward.1} parent=11 // pred_region
          _
        $region32: #{simplenet_forward.1} parent=11 // pred_fallthru
          _
        // Predicated region
        $region33: #{simplenet_forward.1} parent=11 // pred_check
          %p288 = pneg %p186
        $region34: #{simplenet_forward.1} parent=11 // pred_check_branch
          %290 = sbr.rel (%p288) target = $region36
        $region35: #{simplenet_forward.1} parent=11 // pred_region
          _
        $region36: #{simplenet_forward.1} parent=11 // pred_fallthru
          _
        // Predicated region
        $region37: #{simplenet_forward.1} parent=11 // pred_check
          %p291 = pneg %p207
        $region38: #{simplenet_forward.1} parent=11 // pred_check_branch
          %293 = sbr.rel (%p291) target = $region40
        $region39: #{simplenet_forward.1} parent=11 // pred_region
          _
        $region40: #{simplenet_forward.1} parent=11 // pred_fallthru
          _
        // Predicated region
        $region41: #{simplenet_forward.1} parent=11 // pred_check
          %p294 = pneg %p228
        $region42: #{simplenet_forward.1} parent=11 // pred_check_branch
          %296 = sbr.rel (%p294) target = $region44
        $region43: #{simplenet_forward.1} parent=11 // pred_region
          _
        $region44: #{simplenet_forward.1} parent=11 // pred_fallthru
          _
      $region12: #{simplenet_forward.1} parent=5 // pred_fallthru
        _
      %p297 = scmp.lt.s32.totalorder %s18, 5
      // Predicated region
      $region45: #{simplenet_forward.1} parent=5 // pred_check
        %p298 = pneg %p297
      $region46: #{simplenet_forward.1} parent=5 // pred_check_branch
        %300 = sbr.rel (%p298) target = $region48
      $region47: #{simplenet_forward.1} parent=5 // pred_region
        // Predicated region
        $region49: #{simplenet_forward.1} parent=47 // pred_check
          %p301 = pneg %p54
        $region50: #{simplenet_forward.1} parent=47 // pred_check_branch
          %303 = sbr.rel (%p301) target = $region52
        $region51: #{simplenet_forward.1} parent=47 // pred_region
          %p304 = scmp.eq.s32.totalorder %s25, 0
          %s305 = scalar_select %p304, %s26, 0
          %p306 = scmp.lt.s32.totalorder %s305, 0
          %s307 = scalar_select %p306, %s305, 0
          %s308 = smul.addr %s307, 8
          %s309 = scalar_lea.vmem %s0, %s308
          %p310 = scmp.eq.s32.totalorder %s25, 0
          %s311 = scalar_select %p310, %s26, 0
        $region52: #{simplenet_forward.1} parent=47 // pred_fallthru
          _
      $region48: #{simplenet_forward.1} parent=5 // pred_fallthru
        _
      %p312 = scmp.le.s32.totalorder 1, %s18
      %p313 = scmp.lt.s32.totalorder %s18, 6
      %p314 = pnand %p312, %p313
      %p315 = pneg %p314
      // Predicated region
      $region53: #{simplenet_forward.1} parent=5 // pred_check
        _
      $region54: #{simplenet_forward.1} parent=5 // pred_check_branch
        %317 = sbr.rel (%p314) target = $region56
      $region55: #{simplenet_forward.1} parent=5 // pred_region
        %s318 = ssub.s32 %s18, 1
        %p319 = scmp.eq.s32.totalorder %s27, 0
        %s320 = scalar_select %p319, %s28, 0
        %p321 = scmp.lt.s32.totalorder %s320, 0
        %s322 = scalar_select %p321, %s320, 0
        %s323 = smul.addr %s322, 8
        %s324 = scalar_lea.vmem %s0, %s323
        %p325 = pneg %p60
        %p326 = pneg %p57
        %p327 = pneg %p81
        %p328 = pneg %p78
        %p329 = pneg %p102
        %p330 = pneg %p99
        %p331 = pneg %p123
        %p332 = pneg %p120
        %p333 = pneg %p144
        %p334 = pneg %p141
        %p335 = pneg %p165
        %p336 = pneg %p162
        %p337 = pneg %p186
        %p338 = pneg %p183
        %p339 = pneg %p207
        %p340 = pneg %p204
        %p341 = pneg %p228
        %p342 = pneg %p225
        %p343 = pneg %p258
        %p344 = pneg %p255
        %s345 = sand.u32 %s245, 1
        %s346 = scalar_lea.sflag [#allocation13], %s345
        %s347 = sand.u32 %s245, 1
        %s348 = smul.addr %s347, 8
        %s349 = scalar_lea.vmem [#allocation12], %s348
        %p350 = scmp.eq.s32.totalorder %s27, 0
        %s351 = scalar_select %p350, %s28, 0
        %p352 = scmp.lt.s32.totalorder %s351, 0
        %s353 = scalar_select %p352, %s351, 0
        %s354 = smul.addr %s353, 8
        %s355 = scalar_lea.vmem %s0, %s354
        %p356 = scmp.eq.s32.totalorder %s27, 0
        %s357 = scalar_select %p356, %s28, 0
        %p358 = scmp.eq.s32.totalorder %s27, 4
        %s359 = scalar_select %p358, %s28, 0
        %s360 = smul.u32 %s28, 8
        %p361 = scmp.eq.s32.totalorder %s27, 0
        %p362 = scmp.eq.s32.totalorder %s28, 0
        %p363 = pnand %p361, %p362
        %p364 = pneg %p363
        // Predicated region
        $region57: #{simplenet_forward.1} parent=55 // pred_check
          _
        $region58: #{simplenet_forward.1} parent=55 // pred_check_branch
          %366 = sbr.rel (%p363) target = $region60
        $region59: #{simplenet_forward.1} parent=55 // pred_region
          %vm367 = vcmask 253952
          %368 = vst.msk [vmem:[#allocation4] sm:$0x1] %vm367, 0.0
          %369 = vst.msk [vmem:[#allocation5] sm:$0x1] %vm367, 0.0
          %vm370 = vcmask 122880
          %371 = vst.msk [vmem:[#allocation6] sm:$0x1] %vm370, 0.0
          %372 = vst.msk [vmem:[#allocation7] sm:$0x1] %vm370, 0.0
        $region60: #{simplenet_forward.1} parent=55 // pred_fallthru
          _
        // Predicated region
        $region61: #{simplenet_forward.1} parent=55 // pred_check
          %p373 = pneg %p361
        $region62: #{simplenet_forward.1} parent=55 // pred_check_branch
          %375 = sbr.rel (%p373) target = $region64
        $region63: #{simplenet_forward.1} parent=55 // pred_region
          %v376 = vld [vmem:[%s355] sm:$0xff]
          %v377 = vld [vmem:[%s1] sm:$0xff]
          %v378 = vld [vmem:[%s1 + $0x8] sm:$0xff]
          %v379 = vld [vmem:[%s1 + $0x10] sm:$0xff]
          %v380 = vld [vmem:[%s1 + $0x18] sm:$0xff]
          %v381 = vld [vmem:[%s1 + $0x20] sm:$0xff]
          %v382 = vld [vmem:[%s1 + $0x28] sm:$0xff]
          %v383 = vld [vmem:[%s1 + $0x30] sm:$0xff]
          %v384 = vld [vmem:[%s1 + $0x38] sm:$0xff]
          %vm385 = vcmask 523264
          %v387 = vsel %vm385, %v376, 0
          %389 = vmatprep.subr.mxu0 0.0
          %390 = vmatpush1.msra.mxu0 %v377
          %391 = vmatprep.subr.mxu0 0.0
          %392 = vmatpush1.msra.mxu0 %v378
          %393 = vmatprep.subr.mxu0 0.0
          %394 = vmatpush1.msra.mxu0 %v379
          %395 = vmatprep.subr.mxu0 0.0
          %396 = vmatpush1.msra.mxu0 %v380
          %397 = vmatprep.subr.mxu0 0.0
          %398 = vmatpush1.msra.mxu0 %v381
          %399 = vmatprep.subr.mxu0 0.0
          %400 = vmatpush1.msra.mxu0 %v382
          %401 = vmatprep.subr.mxu0 0.0
          %402 = vmatpush1.msra.mxu0 %v383
          %403 = vmatprep.subr.mxu0 0.0
          %404 = vmatpush1.msra.mxu0 %v384
          %405 = vmatprep.subr.mxu0 0.0
          %406 = vmatpush1.msra.mxu0 0.0
          %407 = vmatprep.subr.mxu0 0.0
          %408 = vmatpush1.msra.mxu0 0.0
          %409 = vmatprep.subr.mxu0 0.0
          %410 = vmatpush1.msra.mxu0 0.0
          %411 = vmatprep.subr.mxu0 0.0
          %412 = vmatpush1.msra.mxu0 0.0
          %413 = vmatprep.subr.mxu0 0.0
          %414 = vmatpush1.msra.mxu0 0.0
          %415 = vmatprep.subr.mxu0 0.0
          %416 = vmatpush1.msra.mxu0 0.0
          %417 = vmatprep.subr.mxu0 0.0
          %418 = vmatpush1.msra.mxu0 0.0
          %419 = vmatprep.subr.mxu0 0.0
          %420 = vmatpush1.msra.mxu0 0.0
          %421 = vmatprep.subr.mxu0 0.0
          %422 = vmatpush1.msra.mxu0 0.0
          %423 = vmatprep.subr.mxu0 0.0
          %424 = vmatpush1.msra.mxu0 0.0
          %425 = vmatprep.subr.mxu0 0.0
          %426 = vmatpush1.msra.mxu0 0.0
          %427 = vmatprep.subr.mxu0 0.0
          %428 = vmatpush1.msra.mxu0 0.0
          %429 = vmatprep.subr.mxu0 0.0
          %430 = vmatpush1.msra.mxu0 0.0
          %431 = vmatprep.subr.mxu0 0.0
          %432 = vmatpush1.msra.mxu0 0.0
          %433 = vmatprep.subr.mxu0 0.0
          %434 = vmatpush1.msra.mxu0 0.0
          %435 = vmatprep.subr.mxu0 0.0
          %436 = vmatpush1.msra.mxu0 0.0
          %437 = vmatprep.subr.mxu0 0.0
          %438 = vmatpush1.msra.mxu0 0.0
          %439 = vmatprep.subr.mxu0 0.0
          %440 = vmatpush1.msra.mxu0 0.0
          %441 = vmatprep.subr.mxu0 0.0
          %442 = vmatpush1.msra.mxu0 0.0
          %443 = vmatprep.subr.mxu0 0.0
          %444 = vmatpush1.msra.mxu0 0.0
          %445 = vmatprep.subr.mxu0 0.0
          %446 = vmatpush1.msra.mxu0 0.0
          %447 = vmatprep.subr.mxu0 0.0
          %448 = vmatpush1.msra.mxu0 0.0
          %449 = vmatprep.subr.mxu0 0.0
          %450 = vmatpush1.msra.mxu0 0.0
          %451 = vmatprep.subr.mxu0 0.0
          %452 = vmatpush1.msra.mxu0 0.0
          %453 = vmatprep.mubr.f32.mxu0 0.0
          %454 = vmatmul.mubr.f32.gmra.mrb[0].mxu0 %v387
          %v455 = vpop.f32.mrb[0].mxu0
          %v456 = vadd.f32 0.0, %v455
          %v457 = vpop.f32.mrb[0].mxu0
          %458 = vdwg.mxu0
          %s459 = scalar_lea.vmem [#allocation2], %s360
          %vm460 = vcmask 261120
          %461 = vst.msk [vmem:[%s459] sm:$0xff] %vm460, %v456
          %v462 = vld [vmem:[#allocation4] sm:$0x1]
          %v463 = vsel %vm460, %v456, 0.0
          %v464 = vrot.slane %v463, 4
          %v465 = vadd.f32 %v463, %v464
          %v466 = vrot.slane %v465, 2
          %v467 = vadd.f32 %v465, %v466
          %v468 = vrot.slane %v467, 1
          %v469 = vadd.f32 %v467, %v468
          %v470 = vadd.f32 %v462, %v469
          %vm471 = vcmask 253952
          %472 = vst.msk [vmem:[#allocation4] sm:$0x1] %vm471, %v470
        $region64: #{simplenet_forward.1} parent=55 // pred_fallthru
          _
        %p473 = scmp.eq.s32.totalorder %s27, 1
        // Predicated region
        $region65: #{simplenet_forward.1} parent=55 // pred_check
          %p474 = pneg %p473
        $region66: #{simplenet_forward.1} parent=55 // pred_check_branch
          %476 = sbr.rel (%p474) target = $region68
        $region67: #{simplenet_forward.1} parent=55 // pred_region
          %s477 = scalar_lea.vmem [#allocation2], %s360
          %v478 = vld [vmem:[%s477] sm:$0xff]
          %v479 = vld [vmem:[#allocation4] sm:$0x1]
          %v480 = vmul.f32 %v479, 0.125
          %v482 = vlaneseq
          %v483 = vshrl.u32 %v482, 7
          %v484 = vsub.s32 0, %v483
          %v485 = vrot.slane %v480, %v484
          %v487 = vsub.f32 %v478, %v485
          %v488 = vld [vmem:[#allocation5] sm:$0x1]
          %v489 = vmul.f32 %v487, %v487
          %vm490 = vcmask 261120
          %v491 = vsel %vm490, %v489, 0.0
          %v492 = vrot.slane %v491, 4
          %v493 = vadd.f32 %v491, %v492
          %v494 = vrot.slane %v493, 2
          %v495 = vadd.f32 %v493, %v494
          %v496 = vrot.slane %v495, 1
          %v497 = vadd.f32 %v495, %v496
          %v498 = vadd.f32 %v488, %v497
          %vm499 = vcmask 253952
          %500 = vst.msk [vmem:[#allocation5] sm:$0x1] %vm499, %v498
        $region68: #{simplenet_forward.1} parent=55 // pred_fallthru
          _
        %p501 = scmp.eq.s32.totalorder %s27, 2
        // Predicated region
        $region69: #{simplenet_forward.1} parent=55 // pred_check
          %p502 = pneg %p501
        $region70: #{simplenet_forward.1} parent=55 // pred_check_branch
          %504 = sbr.rel (%p502) target = $region72
        $region71: #{simplenet_forward.1} parent=55 // pred_region
          // Predicated region
          $region73: #{simplenet_forward.1} parent=71 // pred_check
            %p505 = pneg %p362
          $region74: #{simplenet_forward.1} parent=71 // pred_check_branch
            %507 = sbr.rel (%p505) target = $region76
          $region75: #{simplenet_forward.1} parent=71 // pred_region
            %v508 = vld [vmem:[#allocation4] sm:$0x1]
            %v509 = vmul.f32 %v508, 0.125
            %v510 = vld [vmem:[#allocation5] sm:$0x1]
            %v511 = vmul.f32 %v510, 0.125
            %v512 = vld [vmem:[%s2] sm:$0x1]
            %v513 = vadd.f32 %v511, 1e-05
            %v514 = vrsqrt.pop %v513
            %v515 = vmul.f32 %v512, %v514
            %vm516 = vcmask 253952
            %517 = vst.msk [vmem:[#allocation8] sm:$0x1] %vm516, %v515
            %v518 = vld [vmem:[%s3] sm:$0x1]
            %v519 = vld [vmem:[#allocation8] sm:$0x1]
            %v520 = vmul.f32 %v509, %v519
            %v521 = vsub.f32 %v518, %v520
            %522 = vst.msk [vmem:[#allocation9] sm:$0x1] %vm516, %v521
          $region76: #{simplenet_forward.1} parent=71 // pred_fallthru
            _
          %s523 = scalar_lea.vmem [#allocation2], %s360
          %v524 = vld [vmem:[%s523] sm:$0xff]
          %v525 = vld [vmem:[#allocation8] sm:$0x1]
          %v527 = vlaneseq
          %v528 = vshrl.u32 %v527, 7
          %v529 = vsub.s32 0, %v528
          %v530 = vrot.slane %v525, %v529
          %v532 = vmul.f32 %v524, %v530
          %v533 = vld [vmem:[#allocation9] sm:$0x1]
          %v535 = vlaneseq
          %v536 = vshrl.u32 %v535, 7
          %v537 = vsub.s32 0, %v536
          %v538 = vrot.slane %v533, %v537
          %v540 = vadd.f32 %v532, %v538
          %vm541 = vcmp.gt.f32.partialorder %v540, 0.0
          %v542 = vmul.f32 %v540, 0.01
          %v543 = vsel %vm541, %v540, %v542
          %v544 = vld [vmem:[%s4] sm:$0xff]
          %v545 = vld [vmem:[%s4 + $0x8] sm:$0xff]
          %v546 = vld [vmem:[%s4 + $0x10] sm:$0xff]
          %v547 = vld [vmem:[%s4 + $0x18] sm:$0xff]
          %vm548 = vcmask 261120
          %v550 = vsel %vm548, %v543, 0
          %552 = vmatprep.subr.mxu0 0.0
          %553 = vmatpush1.msra.mxu0 %v544
          %554 = vmatprep.subr.mxu0 0.0
          %555 = vmatpush1.msra.mxu0 %v545
          %556 = vmatprep.subr.mxu0 0.0
          %557 = vmatpush1.msra.mxu0 %v546
          %558 = vmatprep.subr.mxu0 0.0
          %559 = vmatpush1.msra.mxu0 %v547
          %560 = vmatprep.subr.mxu0 0.0
          %561 = vmatpush1.msra.mxu0 0.0
          %562 = vmatprep.subr.mxu0 0.0
          %563 = vmatpush1.msra.mxu0 0.0
          %564 = vmatprep.subr.mxu0 0.0
          %565 = vmatpush1.msra.mxu0 0.0
          %566 = vmatprep.subr.mxu0 0.0
          %567 = vmatpush1.msra.mxu0 0.0
          %568 = vmatprep.subr.mxu0 0.0
          %569 = vmatpush1.msra.mxu0 0.0
          %570 = vmatprep.subr.mxu0 0.0
          %571 = vmatpush1.msra.mxu0 0.0
          %572 = vmatprep.subr.mxu0 0.0
          %573 = vmatpush1.msra.mxu0 0.0
          %574 = vmatprep.subr.mxu0 0.0
          %575 = vmatpush1.msra.mxu0 0.0
          %576 = vmatprep.subr.mxu0 0.0
          %577 = vmatpush1.msra.mxu0 0.0
          %578 = vmatprep.subr.mxu0 0.0
          %579 = vmatpush1.msra.mxu0 0.0
          %580 = vmatprep.subr.mxu0 0.0
          %581 = vmatpush1.msra.mxu0 0.0
          %582 = vmatprep.subr.mxu0 0.0
          %583 = vmatpush1.msra.mxu0 0.0
          %584 = vmatprep.subr.mxu0 0.0
          %585 = vmatpush1.msra.mxu0 0.0
          %586 = vmatprep.subr.mxu0 0.0
          %587 = vmatpush1.msra.mxu0 0.0
          %588 = vmatprep.subr.mxu0 0.0
          %589 = vmatpush1.msra.mxu0 0.0
          %590 = vmatprep.subr.mxu0 0.0
          %591 = vmatpush1.msra.mxu0 0.0
          %592 = vmatprep.subr.mxu0 0.0
          %593 = vmatpush1.msra.mxu0 0.0
          %594 = vmatprep.subr.mxu0 0.0
          %595 = vmatpush1.msra.mxu0 0.0
          %596 = vmatprep.subr.mxu0 0.0
          %597 = vmatpush1.msra.mxu0 0.0
          %598 = vmatprep.subr.mxu0 0.0
          %599 = vmatpush1.msra.mxu0 0.0
          %600 = vmatprep.subr.mxu0 0.0
          %601 = vmatpush1.msra.mxu0 0.0
          %602 = vmatprep.subr.mxu0 0.0
          %603 = vmatpush1.msra.mxu0 0.0
          %604 = vmatprep.subr.mxu0 0.0
          %605 = vmatpush1.msra.mxu0 0.0
          %606 = vmatprep.subr.mxu0 0.0
          %607 = vmatpush1.msra.mxu0 0.0
          %608 = vmatprep.subr.mxu0 0.0
          %609 = vmatpush1.msra.mxu0 0.0
          %610 = vmatprep.subr.mxu0 0.0
          %611 = vmatpush1.msra.mxu0 0.0
          %612 = vmatprep.subr.mxu0 0.0
          %613 = vmatpush1.msra.mxu0 0.0
          %614 = vmatprep.subr.mxu0 0.0
          %615 = vmatpush1.msra.mxu0 0.0
          %616 = vmatprep.mubr.f32.mxu0 0.0
          %617 = vmatmul.mubr.f32.gmra.mrb[0].mxu0 %v550
          %v618 = vpop.f32.mrb[0].mxu0
          %v619 = vadd.f32 0.0, %v618
          %v620 = vpop.f32.mrb[0].mxu0
          %621 = vdwg.mxu0
          %s622 = scalar_lea.vmem [#allocation3], %s360
          %vm623 = vcmask 130048
          %624 = vst.msk [vmem:[%s622] sm:$0xff] %vm623, %v619
          %v625 = vld [vmem:[#allocation6] sm:$0x1]
          %v626 = vsel %vm623, %v619, 0.0
          %v627 = vrot.slane %v626, 4
          %v628 = vadd.f32 %v626, %v627
          %v629 = vrot.slane %v628, 2
          %v630 = vadd.f32 %v628, %v629
          %v631 = vrot.slane %v630, 1
          %v632 = vadd.f32 %v630, %v631
          %v633 = vadd.f32 %v625, %v632
          %vm634 = vcmask 122880
          %635 = vst.msk [vmem:[#allocation6] sm:$0x1] %vm634, %v633
        $region72: #{simplenet_forward.1} parent=55 // pred_fallthru
          _
        %p636 = scmp.eq.s32.totalorder %s27, 3
        // Predicated region
        $region77: #{simplenet_forward.1} parent=55 // pred_check
          %p637 = pneg %p636
        $region78: #{simplenet_forward.1} parent=55 // pred_check_branch
          %639 = sbr.rel (%p637) target = $region80
        $region79: #{simplenet_forward.1} parent=55 // pred_region
          %s640 = scalar_lea.vmem [#allocation3], %s360
          %v641 = vld [vmem:[%s640] sm:$0xff]
          %v642 = vld [vmem:[#allocation6] sm:$0x1]
          %v643 = vmul.f32 %v642, 0.125
          %v645 = vlaneseq
          %v646 = vshrl.u32 %v645, 7
          %v647 = vsub.s32 0, %v646
          %v648 = vrot.slane %v643, %v647
          %v650 = vsub.f32 %v641, %v648
          %v651 = vld [vmem:[#allocation7] sm:$0x1]
          %v652 = vmul.f32 %v650, %v650
          %vm653 = vcmask 130048
          %v654 = vsel %vm653, %v652, 0.0
          %v655 = vrot.slane %v654, 4
          %v656 = vadd.f32 %v654, %v655
          %v657 = vrot.slane %v656, 2
          %v658 = vadd.f32 %v656, %v657
          %v659 = vrot.slane %v658, 1
          %v660 = vadd.f32 %v658, %v659
          %v661 = vadd.f32 %v651, %v660
          %vm662 = vcmask 122880
          %663 = vst.msk [vmem:[#allocation7] sm:$0x1] %vm662, %v661
        $region80: #{simplenet_forward.1} parent=55 // pred_fallthru
          _
        %p664 = scmp.eq.s32.totalorder %s27, 4
        // Predicated region
        $region81: #{simplenet_forward.1} parent=55 // pred_check
          %p665 = pneg %p664
        $region82: #{simplenet_forward.1} parent=55 // pred_check_branch
          %667 = sbr.rel (%p665) target = $region84
        $region83: #{simplenet_forward.1} parent=55 // pred_region
          // Predicated region
          $region85: #{simplenet_forward.1} parent=83 // pred_check
            %p668 = pneg %p362
          $region86: #{simplenet_forward.1} parent=83 // pred_check_branch
            %670 = sbr.rel (%p668) target = $region88
          $region87: #{simplenet_forward.1} parent=83 // pred_region
            %v671 = vld [vmem:[#allocation6] sm:$0x1]
            %v672 = vmul.f32 %v671, 0.125
            %v673 = vld [vmem:[#allocation7] sm:$0x1]
            %v674 = vmul.f32 %v673, 0.125
            %v675 = vld [vmem:[%s5] sm:$0x1]
            %v676 = vadd.f32 %v674, 1e-05
            %v677 = vrsqrt.pop %v676
            %v678 = vmul.f32 %v675, %v677
            %vm679 = vcmask 122880
            %680 = vst.msk [vmem:[#allocation10] sm:$0x1] %vm679, %v678
            %v681 = vld [vmem:[%s6] sm:$0x1]
            %v682 = vld [vmem:[#allocation10] sm:$0x1]
            %v683 = vmul.f32 %v672, %v682
            %v684 = vsub.f32 %v681, %v683
            %685 = vst.msk [vmem:[#allocation11] sm:$0x1] %vm679, %v684
          $region88: #{simplenet_forward.1} parent=83 // pred_fallthru
            _
          %s686 = scalar_lea.vmem [#allocation3], %s360
          %v687 = vld [vmem:[%s686] sm:$0xff]
          %v688 = vld [vmem:[#allocation10] sm:$0x1]
          %v690 = vlaneseq
          %v691 = vshrl.u32 %v690, 7
          %v692 = vsub.s32 0, %v691
          %v693 = vrot.slane %v688, %v692
          %v695 = vmul.f32 %v687, %v693
          %v696 = vld [vmem:[#allocation11] sm:$0x1]
          %v698 = vlaneseq
          %v699 = vshrl.u32 %v698, 7
          %v700 = vsub.s32 0, %v699
          %v701 = vrot.slane %v696, %v700
          %v703 = vadd.f32 %v695, %v701
          %vm704 = vcmp.gt.f32.partialorder %v703, 0.0
          %v705 = vmul.f32 %v703, 0.01
          %v706 = vsel %vm704, %v703, %v705
          %v707 = vld [vmem:[%s7] sm:$0xff]
          %v708 = vld [vmem:[%s7 + $0x8] sm:$0xff]
          %v709 = vld [vmem:[%s8] sm:$0x1]
          %v711 = vlaneseq
          %v712 = vshrl.u32 %v711, 7
          %v713 = vsub.s32 0, %v712
          %v714 = vrot.slane %v709, %v713
          %vm716 = vcmask 130048
          %v718 = vsel %vm716, %v706, 0
          %720 = vmatprep.subr.mxu0 0.0
          %721 = vmatpush1.msra.mxu0 %v707
          %722 = vmatprep.subr.mxu0 0.0
          %723 = vmatpush1.msra.mxu0 %v708
          %724 = vmatprep.subr.mxu0 0.0
          %725 = vmatpush1.msra.mxu0 0.0
          %726 = vmatprep.subr.mxu0 0.0
          %727 = vmatpush1.msra.mxu0 0.0
          %728 = vmatprep.subr.mxu0 0.0
          %729 = vmatpush1.msra.mxu0 0.0
          %730 = vmatprep.subr.mxu0 0.0
          %731 = vmatpush1.msra.mxu0 0.0
          %732 = vmatprep.subr.mxu0 0.0
          %733 = vmatpush1.msra.mxu0 0.0
          %734 = vmatprep.subr.mxu0 0.0
          %735 = vmatpush1.msra.mxu0 0.0
          %736 = vmatprep.subr.mxu0 0.0
          %737 = vmatpush1.msra.mxu0 0.0
          %738 = vmatprep.subr.mxu0 0.0
          %739 = vmatpush1.msra.mxu0 0.0
          %740 = vmatprep.subr.mxu0 0.0
          %741 = vmatpush1.msra.mxu0 0.0
          %742 = vmatprep.subr.mxu0 0.0
          %743 = vmatpush1.msra.mxu0 0.0
          %744 = vmatprep.subr.mxu0 0.0
          %745 = vmatpush1.msra.mxu0 0.0
          %746 = vmatprep.subr.mxu0 0.0
          %747 = vmatpush1.msra.mxu0 0.0
          %748 = vmatprep.subr.mxu0 0.0
          %749 = vmatpush1.msra.mxu0 0.0
          %750 = vmatprep.subr.mxu0 0.0
          %751 = vmatpush1.msra.mxu0 0.0
          %752 = vmatprep.subr.mxu0 0.0
          %753 = vmatpush1.msra.mxu0 0.0
          %754 = vmatprep.subr.mxu0 0.0
          %755 = vmatpush1.msra.mxu0 0.0
          %756 = vmatprep.subr.mxu0 0.0
          %757 = vmatpush1.msra.mxu0 0.0
          %758 = vmatprep.subr.mxu0 0.0
          %759 = vmatpush1.msra.mxu0 0.0
          %760 = vmatprep.subr.mxu0 0.0
          %761 = vmatpush1.msra.mxu0 0.0
          %762 = vmatprep.subr.mxu0 0.0
          %763 = vmatpush1.msra.mxu0 0.0
          %764 = vmatprep.subr.mxu0 0.0
          %765 = vmatpush1.msra.mxu0 0.0
          %766 = vmatprep.subr.mxu0 0.0
          %767 = vmatpush1.msra.mxu0 0.0
          %768 = vmatprep.subr.mxu0 0.0
          %769 = vmatpush1.msra.mxu0 0.0
          %770 = vmatprep.subr.mxu0 0.0
          %771 = vmatpush1.msra.mxu0 0.0
          %772 = vmatprep.subr.mxu0 0.0
          %773 = vmatpush1.msra.mxu0 0.0
          %774 = vmatprep.subr.mxu0 0.0
          %775 = vmatpush1.msra.mxu0 0.0
          %776 = vmatprep.subr.mxu0 0.0
          %777 = vmatpush1.msra.mxu0 0.0
          %778 = vmatprep.subr.mxu0 0.0
          %779 = vmatpush1.msra.mxu0 0.0
          %780 = vmatprep.subr.mxu0 0.0
          %781 = vmatpush1.msra.mxu0 0.0
          %782 = vmatprep.subr.mxu0 0.0
          %783 = vmatpush1.msra.mxu0 0.0
          %784 = vmatprep.mubr.f32.mxu0 0.0
          %785 = vmatmul.mubr.f32.gmra.mrb[0].mxu0 %v718
          %v786 = vpop.f32.mrb[0].mxu0
          %v787 = vadd.f32 %v714, %v786
          %v788 = vpop.f32.mrb[0].mxu0
          %789 = vdwg.mxu0
          %vm790 = vcmask 80896
          %791 = vst.msk [vmem:[%s349] sm:$0xff] %vm790, %v787
        $region84: #{simplenet_forward.1} parent=55 // pred_fallthru
          _
        %s792 = sand.u32 %s245, 1
        %s793 = scalar_lea.sflag [#allocation13], %s792
        %s794 = sand.u32 %s245, 1
        %s795 = smul.addr %s794, 8
        %s796 = scalar_lea.vmem [#allocation12], %s795
        // Predicated region
        $region89: #{simplenet_forward.1} parent=55 // pred_check
          %p797 = pneg %p255
        $region90: #{simplenet_forward.1} parent=55 // pred_check_branch
          %799 = sbr.rel (%p797) target = $region92
        $region91: #{simplenet_forward.1} parent=55 // pred_region
          %p800 = scmp.eq.s32.totalorder %s27, 4
          %s801 = scalar_select %p800, %s28, 0
          %s803 = ssub.s32 128, 128
          %804 = vsyncadd %s793, %s803
          %s805 = smul.addr %s801, 128
          %s806 = scalar_lea.hbm %s9, %s805
          %s808 = sshll.u32 %s796, 4
          %s809 = int_to_ptr.vmem [resolvable:$true] %s808
          %811 = dma.vmem_to_hbm [thread:$0]  %s809, 128, %s806, %s793
        $region92: #{simplenet_forward.1} parent=55 // pred_fallthru
          _
      $region56: #{simplenet_forward.1} parent=5 // pred_fallthru
        _
      %p812 = scmp.le.s32.totalorder 2, %s18
      // Predicated region
      $region93: #{simplenet_forward.1} parent=5 // pred_check
        %p813 = pneg %p812
      $region94: #{simplenet_forward.1} parent=5 // pred_check_branch
        %815 = sbr.rel (%p813) target = $region96
      $region95: #{simplenet_forward.1} parent=5 // pred_region
        %s816 = ssub.s32 %s18, 2
        // Predicated region
        $region97: #{simplenet_forward.1} parent=95 // pred_check
          %p817 = pneg %p261
        $region98: #{simplenet_forward.1} parent=95 // pred_check_branch
          %819 = sbr.rel (%p817) target = $region100
        $region99: #{simplenet_forward.1} parent=95 // pred_region
          %s820 = sand.u32 %s246, 1
          %s821 = scalar_lea.sflag [#allocation13], %s820
          %s822 = sand.u32 %s246, 1
          %s823 = smul.addr %s822, 8
          %s824 = scalar_lea.vmem [#allocation12], %s823
          %825 = dma.done %s821, 128
        $region100: #{simplenet_forward.1} parent=95 // pred_fallthru
          _
      $region96: #{simplenet_forward.1} parent=5 // pred_fallthru
        _
    $region6: #{simplenet_forward.1} parent=1 // loop_footer
      %s22 = sadd.s32 1, %s18
    $region7: #{simplenet_forward.1} parent=1 // loop_footer_branch
      %17 = sbr.rel target = $region3
    $region8: #{simplenet_forward.1} parent=1 // loop_exit
      _
    %826 = vsyncpa [#allocation13], 1
    %s827 = scalar_lea.sflag [#allocation13], 1
    %828 = vsyncpa %s827, 1

</llo_original>
